<compile_context>
chip_gen: v7x
topology: tpu7x:2x2x1
jax: 0.10.0
libtpu: 0.0.40
codegen_flags: <defaults>
</compile_context>

<pallas_src>
import jax
import jax.numpy as jnp
from jax.experimental import pallas as pl
from jax.experimental.pallas import tpu as pltpu


def _round_up(n, m):
    return ((n + m - 1) // m) * m


def char_rnn_kernel(x_ref, wih_t_ref, whh_t_ref, b_ref, wfc_t_ref, bfc_ref,
                    out_ref):
    """Elman RNN + Linear + LogSoftmax for one sequence of the batch grid.

    x_ref:     (S, I)                      one sequence (batch dim squeezed)
    wih_t_ref: (I, Hp)    whh_t_ref: (Hp, Hp)     -- VMEM-resident weights
    b_ref:     (1, Hp)    (= b_ih + b_hh, zero-padded)
    wfc_t_ref: (Hp, Op)   bfc_ref:   (1, Op)      (padded lanes = -1e30)
    out_ref:   (S, Op)
    """
    seq_len = x_ref.shape[0]
    hp = whh_t_ref.shape[0]

    # (1) Hoisted input projection: one (S,I)@(I,Hp) matmul for all timesteps.
    pre = (jnp.dot(x_ref[...], wih_t_ref[...],
                   preferred_element_type=jnp.float32)
           + b_ref[...])                                   # (S, Hp)

    # Recurrence weight stays as a value across the unrolled loop.
    w_hh = whh_t_ref[...]

    # (2) Only the true serial recurrence is per-step; h stays in registers,
    #     per-step hidden states are collected as values (no VMEM scratch).
    h = jnp.zeros((1, hp), jnp.float32)
    h_steps = []
    for t in range(seq_len):                               # static, unrolled
        h = jnp.tanh(pre[t:t + 1, :]
                     + jnp.dot(h, w_hh, preferred_element_type=jnp.float32))
        h_steps.append(h)
    h_seq = jnp.concatenate(h_steps, axis=0)               # (S, Hp), 1 vreg

    # (3) FC + log-softmax on the whole slab; single lane-dense store.
    y = (jnp.dot(h_seq, wfc_t_ref[...],
                 preferred_element_type=jnp.float32)
         + bfc_ref[...])                                   # (S, Op)
    m = jnp.max(y, axis=-1, keepdims=True)
    shifted = y - m
    lse = jnp.log(jnp.sum(jnp.exp(shifted), axis=-1, keepdims=True))
    out_ref[...] = shifted - lse


def char_rnn_forward(x, params):
    """x: (S, I) or (B, S, I) float32.  Returns (S, O) / (B, S, O) log-probs."""
    w_ih, w_hh, b_ih, b_hh, w_fc, b_fc = params
    squeeze = (x.ndim == 2)
    if squeeze:
        x = x[None]
    B, S, I = x.shape
    H = w_ih.shape[0]
    O = w_fc.shape[0]
    Hp = _round_up(H, 128)
    Op = _round_up(O, 128)

    f32 = jnp.float32
    # Zero-pad hidden dim: padded hidden lanes stay exactly 0 through the
    # recurrence (tanh(0) = 0, zero-padded W_hh rows/cols), so real-column
    # numerics are unchanged.
    wih_t = jnp.zeros((I, Hp), f32).at[:, :H].set(w_ih.T.astype(f32))
    whh_t = jnp.zeros((Hp, Hp), f32).at[:H, :H].set(w_hh.T.astype(f32))
    b = jnp.zeros((1, Hp), f32).at[0, :H].set((b_ih + b_hh).astype(f32))
    # FC: zero rows for padded H; padded output columns get bias -1e30 so they
    # contribute ~exp(-inf)=0 to the log-softmax normalizer (and stay finite).
    wfc_t = jnp.zeros((Hp, Op), f32).at[:H, :O].set(w_fc.T.astype(f32))
    bfc = jnp.full((1, Op), -1e30, f32).at[0, :O].set(b_fc.astype(f32))

    flops_per_seq = 2 * S * (I * Hp + Hp * Hp + Hp * Op)
    weight_bytes = 4 * (wih_t.size + whh_t.size + b.size + wfc_t.size + bfc.size)
    cost = pl.CostEstimate(
        flops=B * flops_per_seq,
        transcendentals=B * S * (Hp + Op),
        bytes_accessed=weight_bytes + 4 * (x.size + B * S * Op),
    )

    out_padded = pl.pallas_call(
        char_rnn_kernel,
        out_shape=jax.ShapeDtypeStruct((B, S, Op), jnp.float32),
        grid=(B,),
        in_specs=[
            # per-sequence block (batch dim squeezed)
            pl.BlockSpec((None, S, I), lambda bb: (bb, 0, 0)),
            # weights: constant index_map -> DMA'd once, resident across grid
            pl.BlockSpec((I, Hp), lambda bb: (0, 0)),
            pl.BlockSpec((Hp, Hp), lambda bb: (0, 0)),
            pl.BlockSpec((1, Hp), lambda bb: (0, 0)),
            pl.BlockSpec((Hp, Op), lambda bb: (0, 0)),
            pl.BlockSpec((1, Op), lambda bb: (0, 0)),
        ],
        out_specs=pl.BlockSpec((None, S, Op), lambda bb: (bb, 0, 0)),
        compiler_params=pltpu.CompilerParams(
            dimension_semantics=("parallel",),      # v7x: split batch over TCs
            vmem_limit_bytes=8 * 1024 * 1024,       # working set << 0.5 MiB
        ),
        cost_estimate=cost,
    )(x.astype(f32), wih_t, whh_t, b, wfc_t, bfc)

    out = out_padded[:, :, :O]
    return out[0] if squeeze else out


def char_rnn_reference(x, params):
    """Pure-JAX reference of the PyTorch forward pass (single sequence)."""
    w_ih, w_hh, b_ih, b_hh, w_fc, b_fc = params
    H = w_ih.shape[0]
    h = jnp.zeros((1, H), jnp.float32)
    outs = []
    for t in range(x.shape[0]):
        x_t = x[t:t + 1]
        h = jnp.tanh(x_t @ w_ih.T + b_ih + h @ w_hh.T + b_hh)
        outs.append(h)
    out = jnp.concatenate(outs, axis=0)           # (S, H)
    y = out @ w_fc.T + b_fc                       # (S, O)
    return jax.nn.log_softmax(y, axis=1)


def init_params(key, input_size, hidden_size, output_size):
    """Deterministic init mimicking PyTorch's uniform(-1/sqrt(H), 1/sqrt(H))."""
    ks = jax.random.split(key, 6)
    bound = 1.0 / jnp.sqrt(hidden_size)
    w_ih = jax.random.uniform(ks[0], (hidden_size, input_size), jnp.float32,
                              -bound, bound)
    w_hh = jax.random.uniform(ks[1], (hidden_size, hidden_size), jnp.float32,
                              -bound, bound)
    b_ih = jax.random.uniform(ks[2], (hidden_size,), jnp.float32, -bound, bound)
    b_hh = jax.random.uniform(ks[3], (hidden_size,), jnp.float32, -bound, bound)
    w_fc = jax.random.uniform(ks[4], (output_size, hidden_size), jnp.float32,
                              -bound, bound)
    b_fc = jax.random.uniform(ks[5], (output_size,), jnp.float32, -bound, bound)
    return (w_ih, w_hh, b_ih, b_hh, w_fc, b_fc)


if __name__ == "__main__":
    seq_len = 8
    input_size = 16      # one-hot vocab size
    hidden_size = 32
    output_size = input_size

    key = jax.random.PRNGKey(0)
    k_x, k_p, k_b = jax.random.split(key, 3)

    # Synthetic one-hot character sequence (like x_batch[:-1] in the script).
    char_ids = jax.random.randint(k_x, (seq_len,), 0, input_size)
    x = jax.nn.one_hot(char_ids, input_size, dtype=jnp.float32)   # (S, I)

    params = init_params(k_p, input_size, hidden_size, output_size)

    # Single-sequence path (matches the PyTorch module's unbatched forward).
    y_kernel = jax.block_until_ready(char_rnn_forward(x, params))
    y_ref = char_rnn_reference(x, params)
    assert y_kernel.shape == (seq_len, output_size)
    assert jnp.allclose(y_kernel, y_ref, atol=1e-3, rtol=1e-3), "mismatch vs reference"

    # Batched path: one pallas_call, grid over batch, weights resident in VMEM.
    batch = 4
    ids_b = jax.random.randint(k_b, (batch, seq_len), 0, input_size)
    x_b = jax.nn.one_hot(ids_b, input_size, dtype=jnp.float32)    # (B, S, I)
    y_b = jax.block_until_ready(char_rnn_forward(x_b, params))
    y_b_ref = jnp.stack([char_rnn_reference(x_b[i], params) for i in range(batch)])
    assert y_b.shape == (batch, seq_len, output_size)
    assert jnp.allclose(y_b, y_b_ref, atol=1e-3, rtol=1e-3), "batched mismatch"

    print("KERNEL_OK")
</pallas_src>

<mosaic_0001>
module attributes {stable_mosaic.version = 11 : i64} {
  func.func @char_rnn_kernel(%arg0: i32, %arg1: memref<1x8x16xf32, #tpu.memory_space<vmem>>, %arg2: memref<16x128xf32, #tpu.memory_space<vmem>>, %arg3: memref<128x128xf32, #tpu.memory_space<vmem>>, %arg4: memref<1x128xf32, #tpu.memory_space<vmem>>, %arg5: memref<128x128xf32, #tpu.memory_space<vmem>>, %arg6: memref<1x128xf32, #tpu.memory_space<vmem>>, %arg7: memref<1x8x128xf32, #tpu.memory_space<vmem>>) attributes {dimension_semantics = [#tpu.dimension_semantics<parallel>], iteration_bounds = array<i64: 1>, scalar_prefetch = 0 : i64, scratch_operands = 0 : i64, tpu.core_type = #tpu.core_type<tc>, window_params = [{transform_indices = @transform_0, window_bounds = array<i64: 1, 8, 16>}, {pipeline_mode = #tpu.pipeline_mode<synchronous>, transform_indices = @transform_1, window_bounds = array<i64: 16, 128>}, {pipeline_mode = #tpu.pipeline_mode<synchronous>, transform_indices = @transform_2, window_bounds = array<i64: 128, 128>}, {pipeline_mode = #tpu.pipeline_mode<synchronous>, transform_indices = @transform_3, window_bounds = array<i64: 1, 128>}, {pipeline_mode = #tpu.pipeline_mode<synchronous>, transform_indices = @transform_4, window_bounds = array<i64: 128, 128>}, {pipeline_mode = #tpu.pipeline_mode<synchronous>, transform_indices = @transform_5, window_bounds = array<i64: 1, 128>}, {transform_indices = @transform_6, window_bounds = array<i64: 1, 8, 128>}]} {
    %c0 = arith.constant 0 : index
    %c0_0 = arith.constant 0 : index
    %c0_1 = arith.constant 0 : index
    %0 = vector.load %arg1[%c0, %c0_0, %c0_1] : memref<1x8x16xf32, #tpu.memory_space<vmem>>, vector<1x8x16xf32>
    %1 = vector.shape_cast %0 : vector<1x8x16xf32> to vector<8x16xf32>
    %c0_2 = arith.constant 0 : index
    %c0_3 = arith.constant 0 : index
    %2 = vector.load %arg2[%c0_2, %c0_3] : memref<16x128xf32, #tpu.memory_space<vmem>>, vector<16x128xf32>
    %cst = arith.constant dense<0.000000e+00> : vector<8x128xf32>
    %3 = tpu.matmul %1, %2, %cst {dimension_numbers = #tpu.dot_dimension_numbers<[1], [0], [0], [1], [0, 0, 1, 1], [], []>} : vector<8x16xf32>, vector<16x128xf32>, vector<8x128xf32> -> vector<8x128xf32>
    %c0_4 = arith.constant 0 : index
    %c0_5 = arith.constant 0 : index
    %4 = vector.load %arg4[%c0_4, %c0_5] : memref<1x128xf32, #tpu.memory_space<vmem>>, vector<1x128xf32>
    %5 = vector.broadcast %4 : vector<1x128xf32> to vector<8x128xf32>
    %6 = arith.addf %3, %5 : vector<8x128xf32>
    %c0_6 = arith.constant 0 : index
    %c0_7 = arith.constant 0 : index
    %7 = vector.load %arg3[%c0_6, %c0_7] : memref<128x128xf32, #tpu.memory_space<vmem>>, vector<128x128xf32>
    %cst_8 = arith.constant 0.000000e+00 : f32
    %8 = vector.broadcast %cst_8 : f32 to vector<1x128xf32>
    %9 = vector.extract_strided_slice %6 {offsets = [0, 0], sizes = [1, 128], strides = [1, 1]} : vector<8x128xf32> to vector<1x128xf32>
    %cst_9 = arith.constant dense<0.000000e+00> : vector<1x128xf32>
    %10 = tpu.matmul %8, %7, %cst_9 {dimension_numbers = #tpu.dot_dimension_numbers<[1], [0], [0], [1], [0, 0, 1, 1], [], []>} : vector<1x128xf32>, vector<128x128xf32>, vector<1x128xf32> -> vector<1x128xf32>
    %11 = arith.addf %9, %10 : vector<1x128xf32>
    %12 = math.tanh %11 : vector<1x128xf32>
    %13 = vector.extract_strided_slice %6 {offsets = [1, 0], sizes = [1, 128], strides = [1, 1]} : vector<8x128xf32> to vector<1x128xf32>
    %cst_10 = arith.constant dense<0.000000e+00> : vector<1x128xf32>
    %14 = tpu.matmul %12, %7, %cst_10 {dimension_numbers = #tpu.dot_dimension_numbers<[1], [0], [0], [1], [0, 0, 1, 1], [], []>} : vector<1x128xf32>, vector<128x128xf32>, vector<1x128xf32> -> vector<1x128xf32>
    %15 = arith.addf %13, %14 : vector<1x128xf32>
    %16 = math.tanh %15 : vector<1x128xf32>
    %17 = vector.extract_strided_slice %6 {offsets = [2, 0], sizes = [1, 128], strides = [1, 1]} : vector<8x128xf32> to vector<1x128xf32>
    %cst_11 = arith.constant dense<0.000000e+00> : vector<1x128xf32>
    %18 = tpu.matmul %16, %7, %cst_11 {dimension_numbers = #tpu.dot_dimension_numbers<[1], [0], [0], [1], [0, 0, 1, 1], [], []>} : vector<1x128xf32>, vector<128x128xf32>, vector<1x128xf32> -> vector<1x128xf32>
    %19 = arith.addf %17, %18 : vector<1x128xf32>
    %20 = math.tanh %19 : vector<1x128xf32>
    %21 = vector.extract_strided_slice %6 {offsets = [3, 0], sizes = [1, 128], strides = [1, 1]} : vector<8x128xf32> to vector<1x128xf32>
    %cst_12 = arith.constant dense<0.000000e+00> : vector<1x128xf32>
    %22 = tpu.matmul %20, %7, %cst_12 {dimension_numbers = #tpu.dot_dimension_numbers<[1], [0], [0], [1], [0, 0, 1, 1], [], []>} : vector<1x128xf32>, vector<128x128xf32>, vector<1x128xf32> -> vector<1x128xf32>
    %23 = arith.addf %21, %22 : vector<1x128xf32>
    %24 = math.tanh %23 : vector<1x128xf32>
    %25 = vector.extract_strided_slice %6 {offsets = [4, 0], sizes = [1, 128], strides = [1, 1]} : vector<8x128xf32> to vector<1x128xf32>
    %cst_13 = arith.constant dense<0.000000e+00> : vector<1x128xf32>
    %26 = tpu.matmul %24, %7, %cst_13 {dimension_numbers = #tpu.dot_dimension_numbers<[1], [0], [0], [1], [0, 0, 1, 1], [], []>} : vector<1x128xf32>, vector<128x128xf32>, vector<1x128xf32> -> vector<1x128xf32>
    %27 = arith.addf %25, %26 : vector<1x128xf32>
    %28 = math.tanh %27 : vector<1x128xf32>
    %29 = vector.extract_strided_slice %6 {offsets = [5, 0], sizes = [1, 128], strides = [1, 1]} : vector<8x128xf32> to vector<1x128xf32>
    %cst_14 = arith.constant dense<0.000000e+00> : vector<1x128xf32>
    %30 = tpu.matmul %28, %7, %cst_14 {dimension_numbers = #tpu.dot_dimension_numbers<[1], [0], [0], [1], [0, 0, 1, 1], [], []>} : vector<1x128xf32>, vector<128x128xf32>, vector<1x128xf32> -> vector<1x128xf32>
    %31 = arith.addf %29, %30 : vector<1x128xf32>
    %32 = math.tanh %31 : vector<1x128xf32>
    %33 = vector.extract_strided_slice %6 {offsets = [6, 0], sizes = [1, 128], strides = [1, 1]} : vector<8x128xf32> to vector<1x128xf32>
    %cst_15 = arith.constant dense<0.000000e+00> : vector<1x128xf32>
    %34 = tpu.matmul %32, %7, %cst_15 {dimension_numbers = #tpu.dot_dimension_numbers<[1], [0], [0], [1], [0, 0, 1, 1], [], []>} : vector<1x128xf32>, vector<128x128xf32>, vector<1x128xf32> -> vector<1x128xf32>
    %35 = arith.addf %33, %34 : vector<1x128xf32>
    %36 = math.tanh %35 : vector<1x128xf32>
    %37 = vector.extract_strided_slice %6 {offsets = [7, 0], sizes = [1, 128], strides = [1, 1]} : vector<8x128xf32> to vector<1x128xf32>
    %cst_16 = arith.constant dense<0.000000e+00> : vector<1x128xf32>
    %38 = tpu.matmul %36, %7, %cst_16 {dimension_numbers = #tpu.dot_dimension_numbers<[1], [0], [0], [1], [0, 0, 1, 1], [], []>} : vector<1x128xf32>, vector<128x128xf32>, vector<1x128xf32> -> vector<1x128xf32>
    %39 = arith.addf %37, %38 : vector<1x128xf32>
    %40 = math.tanh %39 : vector<1x128xf32>
    %41 = tpu.concatenate %12, %16, %20, %24, %28, %32, %36, %40 in 0 : vector<1x128xf32>, vector<1x128xf32>, vector<1x128xf32>, vector<1x128xf32>, vector<1x128xf32>, vector<1x128xf32>, vector<1x128xf32>, vector<1x128xf32> -> vector<8x128xf32>
    %c0_17 = arith.constant 0 : index
    %c0_18 = arith.constant 0 : index
    %42 = vector.load %arg5[%c0_17, %c0_18] : memref<128x128xf32, #tpu.memory_space<vmem>>, vector<128x128xf32>
    %cst_19 = arith.constant dense<0.000000e+00> : vector<8x128xf32>
    %43 = tpu.matmul %41, %42, %cst_19 {dimension_numbers = #tpu.dot_dimension_numbers<[1], [0], [0], [1], [0, 0, 1, 1], [], []>} : vector<8x128xf32>, vector<128x128xf32>, vector<8x128xf32> -> vector<8x128xf32>
    %c0_20 = arith.constant 0 : index
    %c0_21 = arith.constant 0 : index
    %44 = vector.load %arg6[%c0_20, %c0_21] : memref<1x128xf32, #tpu.memory_space<vmem>>, vector<1x128xf32>
    %45 = vector.broadcast %44 : vector<1x128xf32> to vector<8x128xf32>
    %46 = arith.addf %43, %45 : vector<8x128xf32>
    %cst_22 = arith.constant dense<0xFF800000> : vector<8xf32>
    %47 = vector.multi_reduction <maximumf>, %46, %cst_22 [1] : vector<8x128xf32> to vector<8xf32>
    %48 = vector.shape_cast %47 : vector<8xf32> to vector<8x1xf32>
    %49 = vector.broadcast %48 : vector<8x1xf32> to vector<8x128xf32>
    %50 = arith.subf %46, %49 : vector<8x128xf32>
    %51 = math.exp %50 : vector<8x128xf32>
    %cst_23 = arith.constant dense<0.000000e+00> : vector<8xf32>
    %52 = vector.multi_reduction <add>, %51, %cst_23 [1] : vector<8x128xf32> to vector<8xf32>
    %53 = vector.shape_cast %52 : vector<8xf32> to vector<8x1xf32>
    %54 = math.log %53 : vector<8x1xf32>
    %55 = vector.broadcast %54 : vector<8x1xf32> to vector<8x128xf32>
    %56 = arith.subf %50, %55 : vector<8x128xf32>
    %c0_24 = arith.constant 0 : index
    %c0_25 = arith.constant 0 : index
    %c0_26 = arith.constant 0 : index
    %57 = vector.load %arg7[%c0_24, %c0_25, %c0_26] : memref<1x8x128xf32, #tpu.memory_space<vmem>>, vector<1x8x128xf32>
    %58 = vector.shape_cast %57 : vector<1x8x128xf32> to vector<8x128xf32>
    %59 = vector.shape_cast %56 : vector<8x128xf32> to vector<1x8x128xf32>
    tpu.vector_store %arg7[%c0_24, %c0_25, %c0_26], %59 {strides = array<i32>} : memref<1x8x128xf32, #tpu.memory_space<vmem>>, vector<1x8x128xf32>,
    return
  }
  func.func @transform_0(%arg0: i32) -> (i32, i32, i32) {
    %c0_i32 = arith.constant 0 : i32
    %c0_i32_0 = arith.constant 0 : i32
    %c0_i32_1 = arith.constant 0 : i32
    return %arg0, %c0_i32, %c0_i32_0 : i32, i32, i32
  }
  func.func @transform_1(%arg0: i32) -> (i32, i32) {
    %c0_i32 = arith.constant 0 : i32
    %c0_i32_0 = arith.constant 0 : i32
    %c0_i32_1 = arith.constant 0 : i32
    return %c0_i32, %c0_i32_0 : i32, i32
  }
  func.func @transform_2(%arg0: i32) -> (i32, i32) {
    %c0_i32 = arith.constant 0 : i32
    %c0_i32_0 = arith.constant 0 : i32
    %c0_i32_1 = arith.constant 0 : i32
    return %c0_i32, %c0_i32_0 : i32, i32
  }
  func.func @transform_3(%arg0: i32) -> (i32, i32) {
    %c0_i32 = arith.constant 0 : i32
    %c0_i32_0 = arith.constant 0 : i32
    %c0_i32_1 = arith.constant 0 : i32
    return %c0_i32, %c0_i32_0 : i32, i32
  }
  func.func @transform_4(%arg0: i32) -> (i32, i32) {
    %c0_i32 = arith.constant 0 : i32
    %c0_i32_0 = arith.constant 0 : i32
    %c0_i32_1 = arith.constant 0 : i32
    return %c0_i32, %c0_i32_0 : i32, i32
  }
  func.func @transform_5(%arg0: i32) -> (i32, i32) {
    %c0_i32 = arith.constant 0 : i32
    %c0_i32_0 = arith.constant 0 : i32
    %c0_i32_1 = arith.constant 0 : i32
    return %c0_i32, %c0_i32_0 : i32, i32
  }
  func.func @transform_6(%arg0: i32) -> (i32, i32, i32) {
    %c0_i32 = arith.constant 0 : i32
    %c0_i32_0 = arith.constant 0 : i32
    %c0_i32_1 = arith.constant 0 : i32
    return %arg0, %c0_i32, %c0_i32_0 : i32, i32, i32
  }
}

</mosaic_0001>

<llo_original>
// kernel: tpu_custom_call.1
$region0: #{tpu_custom_call.1}
  #allocation0 [shape = 'u32[]', space=smem, size = 0x4, offset = 0x4, fixed_abs, tag = 'smem constant byte address 0x4 - core index']
  #allocation1 [shape = 'u32[144,128]{1,0:T(1,128)}', space=vmem, size = 0x12000, scoped, tag = 'internal scratch']
  %s0 = inlined_call_operand.hbm [shape: f32[1,8,16], index: 0, kind: input, shape index: {}]
  %s1 = inlined_call_operand.hbm [shape: f32[16,128], index: 1, kind: input, shape index: {}]
  %s2 = inlined_call_operand.hbm [shape: f32[128,128], index: 2, kind: input, shape index: {}]
  %s3 = inlined_call_operand.vmem [shape: f32[1,128], index: 3, kind: input, shape index: {}]
  %s4 = inlined_call_operand.hbm [shape: f32[128,128], index: 4, kind: input, shape index: {}]
  %s5 = inlined_call_operand.vmem [shape: f32[1,128], index: 5, kind: input, shape index: {}]
  %s6 = inlined_call_operand.hbm [shape: f32[1,8,128], index: 6, kind: output, shape index: {}]
  %s7 = sld [smem:[#allocation0]]
  $region50: #{tpu_custom_call.1} parent=0
    _
  %s9 = ssub.s32 1, %s7
  %s10 = scalar_select 0, %s9, %s7
  $region1: #{tpu_custom_call.1} parent=0
    #allocation2 [shape = 'u8[4096]{0}', space=vmem, size = 0x1000, scoped, tag = 'input window, operand 0, single buffered']
    #allocation3 [shape = 's32[1]{0}', space=sflag, size = 0x4, scoped, tag = 'scoped memory for tpu_custom_call.1']
    #allocation4 [shape = 's32[1]{0}', space=sflag, size = 0x4, scoped, tag = 'scoped memory for tpu_custom_call.1']
    #allocation5 [shape = 'u8[8192]{0}', space=vmem, size = 0x2000, scoped, tag = 'input window, operand 1, single buffered']
    #allocation6 [shape = 's32[1]{0}', space=sflag, size = 0x4, scoped, tag = 'scoped memory for tpu_custom_call.1']
    #allocation7 [shape = 'u8[65536]{0}', space=vmem, size = 0x10000, scoped, tag = 'input window, operand 2, single buffered']
    #allocation8 [shape = 'u8[65536]{0}', space=vmem, size = 0x10000, scoped, tag = 'input window, operand 4, single buffered']
    #allocation9 [shape = 's32[1]{0}', space=sflag, size = 0x4, scoped, tag = 'scoped memory for tpu_custom_call.1']
    #allocation10 [shape = 'u8[4096]{0}', space=vmem, size = 0x1000, scoped, tag = 'output window, operand 0, single buffered']
    %11 = vsyncpa [#allocation3], 0
    %12 = vsyncpa [#allocation6], 0
    %13 = vsyncpa [#allocation9], 0
    %14 = vsyncpa [#allocation4], 0
    // Predicated region
    $region2: #{tpu_custom_call.1} parent=1 // pred_check
      _
    $region3: #{tpu_custom_call.1} parent=1 // pred_check_branch
      %16 = sbr.rel (0) target = $region5
    $region4: #{tpu_custom_call.1} parent=1 // pred_region
      %s18 = ssub.s32 128, 128
      %19 = vsyncadd [#allocation3], %s18
      %s21 = sshll.u32 [#allocation2], 4
      %s22 = int_to_ptr.vmem [resolvable:$true] %s21
      %24 = dma.hbm_to_vmem [thread:$0]  %s0, 128, %s22, [#allocation3]
    $region5: #{tpu_custom_call.1} parent=1 // pred_fallthru
      _
    // Predicated region
    $region6: #{tpu_custom_call.1} parent=1 // pred_check
      _
    $region7: #{tpu_custom_call.1} parent=1 // pred_check_branch
      %26 = sbr.rel (0) target = $region9
    $region8: #{tpu_custom_call.1} parent=1 // pred_region
      %s28 = ssub.s32 256, 256
      %29 = vsyncadd [#allocation6], %s28
      %s30 = sshll.u32 [#allocation5], 4
      %s31 = int_to_ptr.vmem [resolvable:$true] %s30
      %36 = dma.hbm_to_vmem [thread:$0]  %s1, 256, %s31, [#allocation6], 128, 128, 8
    $region9: #{tpu_custom_call.1} parent=1 // pred_fallthru
      _
    // Predicated region
    $region10: #{tpu_custom_call.1} parent=1 // pred_check
      _
    $region11: #{tpu_custom_call.1} parent=1 // pred_check_branch
      %38 = sbr.rel (0) target = $region13
    $region12: #{tpu_custom_call.1} parent=1 // pred_region
      %s40 = ssub.s32 2048, 2048
      %41 = vsyncadd [#allocation6], %s40
      %s42 = sshll.u32 [#allocation7], 4
      %s43 = int_to_ptr.vmem [resolvable:$true] %s42
      %48 = dma.hbm_to_vmem [thread:$0]  %s2, 2048, %s43, [#allocation6], 128, 128, 8
    $region13: #{tpu_custom_call.1} parent=1 // pred_fallthru
      _
    // Predicated region
    $region14: #{tpu_custom_call.1} parent=1 // pred_check
      _
    $region15: #{tpu_custom_call.1} parent=1 // pred_check_branch
      %50 = sbr.rel (0) target = $region17
    $region16: #{tpu_custom_call.1} parent=1 // pred_region
      _
    $region17: #{tpu_custom_call.1} parent=1 // pred_fallthru
      _
    // Predicated region
    $region18: #{tpu_custom_call.1} parent=1 // pred_check
      _
    $region19: #{tpu_custom_call.1} parent=1 // pred_check_branch
      %52 = sbr.rel (0) target = $region21
    $region20: #{tpu_custom_call.1} parent=1 // pred_region
      %s54 = ssub.s32 2048, 2048
      %55 = vsyncadd [#allocation9], %s54
      %s56 = sshll.u32 [#allocation8], 4
      %s57 = int_to_ptr.vmem [resolvable:$true] %s56
      %62 = dma.hbm_to_vmem [thread:$0]  %s4, 2048, %s57, [#allocation9], 128, 128, 8
    $region21: #{tpu_custom_call.1} parent=1 // pred_fallthru
      _
    // Predicated region
    $region22: #{tpu_custom_call.1} parent=1 // pred_check
      _
    $region23: #{tpu_custom_call.1} parent=1 // pred_check_branch
      %64 = sbr.rel (0) target = $region25
    $region24: #{tpu_custom_call.1} parent=1 // pred_region
      _
    $region25: #{tpu_custom_call.1} parent=1 // pred_fallthru
      _
    // Predicated region
    $region26: #{tpu_custom_call.1} parent=1 // pred_check
      _
    $region27: #{tpu_custom_call.1} parent=1 // pred_check_branch
      %66 = sbr.rel (0) target = $region29
    $region28: #{tpu_custom_call.1} parent=1 // pred_region
      %67 = dma.done [#allocation3], 128
    $region29: #{tpu_custom_call.1} parent=1 // pred_fallthru
      _
    // Predicated region
    $region30: #{tpu_custom_call.1} parent=1 // pred_check
      _
    $region31: #{tpu_custom_call.1} parent=1 // pred_check_branch
      %69 = sbr.rel (0) target = $region33
    $region32: #{tpu_custom_call.1} parent=1 // pred_region
      %70 = dma.done [#allocation6], 256
    $region33: #{tpu_custom_call.1} parent=1 // pred_fallthru
      _
    // Predicated region
    $region34: #{tpu_custom_call.1} parent=1 // pred_check
      _
    $region35: #{tpu_custom_call.1} parent=1 // pred_check_branch
      %72 = sbr.rel (0) target = $region37
    $region36: #{tpu_custom_call.1} parent=1 // pred_region
      %73 = dma.done [#allocation6], 2048
    $region37: #{tpu_custom_call.1} parent=1 // pred_fallthru
      _
    // Predicated region
    $region38: #{tpu_custom_call.1} parent=1 // pred_check
      _
    $region39: #{tpu_custom_call.1} parent=1 // pred_check_branch
      %75 = sbr.rel (0) target = $region41
    $region40: #{tpu_custom_call.1} parent=1 // pred_region
      %76 = dma.done [#allocation9], 2048
    $region41: #{tpu_custom_call.1} parent=1 // pred_fallthru
      _
    %v77 = vld [vmem:[#allocation2] sm:$0xff]
    %v78 = vld [vmem:[#allocation5] sm:$0xff]
    %v79 = vld [vmem:[#allocation5 + $0x8] sm:$0xff]
    %v80 = vld [vmem:[%s3] sm:$0x1]
    %v82 = vlaneseq
    %v83 = vshrl.u32 %v82, 7
    %v84 = vsub.s32 0, %v83
    %v85 = vrot.slane %v80, %v84
    %vm87 = vcmask 130048
    %v89 = vsel %vm87, %v77, 0
    %91 = vmatprep.subr.mxu0 0.0
    %92 = vmatpush1.msra.mxu0 %v78
    %93 = vmatprep.subr.mxu0 0.0
    %94 = vmatpush1.msra.mxu0 %v79
    %95 = vmatprep.subr.mxu0 0.0
    %96 = vmatpush1.msra.mxu0 0.0
    %97 = vmatprep.subr.mxu0 0.0
    %98 = vmatpush1.msra.mxu0 0.0
    %99 = vmatprep.subr.mxu0 0.0
    %100 = vmatpush1.msra.mxu0 0.0
    %101 = vmatprep.subr.mxu0 0.0
    %102 = vmatpush1.msra.mxu0 0.0
    %103 = vmatprep.subr.mxu0 0.0
    %104 = vmatpush1.msra.mxu0 0.0
    %105 = vmatprep.subr.mxu0 0.0
    %106 = vmatpush1.msra.mxu0 0.0
    %107 = vmatprep.subr.mxu0 0.0
    %108 = vmatpush1.msra.mxu0 0.0
    %109 = vmatprep.subr.mxu0 0.0
    %110 = vmatpush1.msra.mxu0 0.0
    %111 = vmatprep.subr.mxu0 0.0
    %112 = vmatpush1.msra.mxu0 0.0
    %113 = vmatprep.subr.mxu0 0.0
    %114 = vmatpush1.msra.mxu0 0.0
    %115 = vmatprep.subr.mxu0 0.0
    %116 = vmatpush1.msra.mxu0 0.0
    %117 = vmatprep.subr.mxu0 0.0
    %118 = vmatpush1.msra.mxu0 0.0
    %119 = vmatprep.subr.mxu0 0.0
    %120 = vmatpush1.msra.mxu0 0.0
    %121 = vmatprep.subr.mxu0 0.0
    %122 = vmatpush1.msra.mxu0 0.0
    %123 = vmatprep.subr.mxu0 0.0
    %124 = vmatpush1.msra.mxu0 0.0
    %125 = vmatprep.subr.mxu0 0.0
    %126 = vmatpush1.msra.mxu0 0.0
    %127 = vmatprep.subr.mxu0 0.0
    %128 = vmatpush1.msra.mxu0 0.0
    %129 = vmatprep.subr.mxu0 0.0
    %130 = vmatpush1.msra.mxu0 0.0
    %131 = vmatprep.subr.mxu0 0.0
    %132 = vmatpush1.msra.mxu0 0.0
    %133 = vmatprep.subr.mxu0 0.0
    %134 = vmatpush1.msra.mxu0 0.0
    %135 = vmatprep.subr.mxu0 0.0
    %136 = vmatpush1.msra.mxu0 0.0
    %137 = vmatprep.subr.mxu0 0.0
    %138 = vmatpush1.msra.mxu0 0.0
    %139 = vmatprep.subr.mxu0 0.0
    %140 = vmatpush1.msra.mxu0 0.0
    %141 = vmatprep.subr.mxu0 0.0
    %142 = vmatpush1.msra.mxu0 0.0
    %143 = vmatprep.subr.mxu0 0.0
    %144 = vmatpush1.msra.mxu0 0.0
    %145 = vmatprep.subr.mxu0 0.0
    %146 = vmatpush1.msra.mxu0 0.0
    %147 = vmatprep.subr.mxu0 0.0
    %148 = vmatpush1.msra.mxu0 0.0
    %149 = vmatprep.subr.mxu0 0.0
    %150 = vmatpush1.msra.mxu0 0.0
    %151 = vmatprep.subr.mxu0 0.0
    %152 = vmatpush1.msra.mxu0 0.0
    %153 = vmatprep.subr.mxu0 0.0
    %154 = vmatpush1.msra.mxu0 0.0
    %155 = vmatprep.mubr.f32.mxu0 0.0
    %156 = vmatmul.mubr.f32.gmra.mrb[0].mxu0 %v89
    %v157 = vpop.f32.mrb[0].mxu0
    %v158 = vadd.f32 %v85, %v157
    %v159 = vpop.f32.mrb[0].mxu0
    %160 = vdwg.mxu0
    %v161 = vld [vmem:[#allocation7] sm:$0xff]
    %v162 = vld [vmem:[#allocation7 + $0x8] sm:$0xff]
    %v163 = vld [vmem:[#allocation7 + $0x10] sm:$0xff]
    %v164 = vld [vmem:[#allocation7 + $0x18] sm:$0xff]
    %v165 = vld [vmem:[#allocation7 + $0x20] sm:$0xff]
    %v166 = vld [vmem:[#allocation7 + $0x28] sm:$0xff]
    %v167 = vld [vmem:[#allocation7 + $0x30] sm:$0xff]
    %v168 = vld [vmem:[#allocation7 + $0x38] sm:$0xff]
    %v169 = vld [vmem:[#allocation7 + $0x40] sm:$0xff]
    %v170 = vld [vmem:[#allocation7 + $0x48] sm:$0xff]
    %v171 = vld [vmem:[#allocation7 + $0x50] sm:$0xff]
    %v172 = vld [vmem:[#allocation7 + $0x58] sm:$0xff]
    %v173 = vld [vmem:[#allocation7 + $0x60] sm:$0xff]
    %v174 = vld [vmem:[#allocation7 + $0x68] sm:$0xff]
    %v175 = vld [vmem:[#allocation7 + $0x70] sm:$0xff]
    %v176 = vld [vmem:[#allocation7 + $0x78] sm:$0xff]
    %177 = vmatprep.subr.mxu0 0.0
    %178 = vmatpush1.msra.mxu0 %v161
    %179 = vmatprep.subr.mxu0 0.0
    %180 = vmatpush1.msra.mxu0 %v162
    %181 = vmatprep.subr.mxu0 0.0
    %182 = vmatpush1.msra.mxu0 %v163
    %183 = vmatprep.subr.mxu0 0.0
    %184 = vmatpush1.msra.mxu0 %v164
    %185 = vmatprep.subr.mxu0 0.0
    %186 = vmatpush1.msra.mxu0 %v165
    %187 = vmatprep.subr.mxu0 0.0
    %188 = vmatpush1.msra.mxu0 %v166
    %189 = vmatprep.subr.mxu0 0.0
    %190 = vmatpush1.msra.mxu0 %v167
    %191 = vmatprep.subr.mxu0 0.0
    %192 = vmatpush1.msra.mxu0 %v168
    %193 = vmatprep.subr.mxu0 0.0
    %194 = vmatpush1.msra.mxu0 %v169
    %195 = vmatprep.subr.mxu0 0.0
    %196 = vmatpush1.msra.mxu0 %v170
    %197 = vmatprep.subr.mxu0 0.0
    %198 = vmatpush1.msra.mxu0 %v171
    %199 = vmatprep.subr.mxu0 0.0
    %200 = vmatpush1.msra.mxu0 %v172
    %201 = vmatprep.subr.mxu0 0.0
    %202 = vmatpush1.msra.mxu0 %v173
    %203 = vmatprep.subr.mxu0 0.0
    %204 = vmatpush1.msra.mxu0 %v174
    %205 = vmatprep.subr.mxu0 0.0
    %206 = vmatpush1.msra.mxu0 %v175
    %207 = vmatprep.subr.mxu0 0.0
    %208 = vmatpush1.msra.mxu0 %v176
    %209 = vmatprep.subr.mxu0 0.0
    %210 = vmatpush1.msra.mxu0 0.0
    %211 = vmatprep.subr.mxu0 0.0
    %212 = vmatpush1.msra.mxu0 0.0
    %213 = vmatprep.subr.mxu0 0.0
    %214 = vmatpush1.msra.mxu0 0.0
    %215 = vmatprep.subr.mxu0 0.0
    %216 = vmatpush1.msra.mxu0 0.0
    %217 = vmatprep.subr.mxu0 0.0
    %218 = vmatpush1.msra.mxu0 0.0
    %219 = vmatprep.subr.mxu0 0.0
    %220 = vmatpush1.msra.mxu0 0.0
    %221 = vmatprep.subr.mxu0 0.0
    %222 = vmatpush1.msra.mxu0 0.0
    %223 = vmatprep.subr.mxu0 0.0
    %224 = vmatpush1.msra.mxu0 0.0
    %225 = vmatprep.subr.mxu0 0.0
    %226 = vmatpush1.msra.mxu0 0.0
    %227 = vmatprep.subr.mxu0 0.0
    %228 = vmatpush1.msra.mxu0 0.0
    %229 = vmatprep.subr.mxu0 0.0
    %230 = vmatpush1.msra.mxu0 0.0
    %231 = vmatprep.subr.mxu0 0.0
    %232 = vmatpush1.msra.mxu0 0.0
    %233 = vmatprep.subr.mxu0 0.0
    %234 = vmatpush1.msra.mxu0 0.0
    %235 = vmatprep.subr.mxu0 0.0
    %236 = vmatpush1.msra.mxu0 0.0
    %237 = vmatprep.subr.mxu0 0.0
    %238 = vmatpush1.msra.mxu0 0.0
    %239 = vmatprep.subr.mxu0 0.0
    %240 = vmatpush1.msra.mxu0 0.0
    %241 = vmatprep.mubr.f32.mxu0 0.0
    %242 = vmatmul.mubr.f32.gmra.mrb[0].mxu0 0.0
    %v243 = vpop.f32.mrb[0].mxu0
    %v244 = vadd.f32 0.0, %v243
    %v245 = vpop.f32.mrb[0].mxu0
    %246 = vdwg.mxu0
    %v247 = vadd.f32 %v158, %v244
    %v248 = vtanh.pop %v247
    %249 = vmatprep.subr.mxu0 0.0
    %250 = vmatpush1.msra.mxu0 %v161
    %251 = vmatprep.subr.mxu0 0.0
    %252 = vmatpush1.msra.mxu0 %v162
    %253 = vmatprep.subr.mxu0 0.0
    %254 = vmatpush1.msra.mxu0 %v163
    %255 = vmatprep.subr.mxu0 0.0
    %256 = vmatpush1.msra.mxu0 %v164
    %257 = vmatprep.subr.mxu0 0.0
    %258 = vmatpush1.msra.mxu0 %v165
    %259 = vmatprep.subr.mxu0 0.0
    %260 = vmatpush1.msra.mxu0 %v166
    %261 = vmatprep.subr.mxu0 0.0
    %262 = vmatpush1.msra.mxu0 %v167
    %263 = vmatprep.subr.mxu0 0.0
    %264 = vmatpush1.msra.mxu0 %v168
    %265 = vmatprep.subr.mxu0 0.0
    %266 = vmatpush1.msra.mxu0 %v169
    %267 = vmatprep.subr.mxu0 0.0
    %268 = vmatpush1.msra.mxu0 %v170
    %269 = vmatprep.subr.mxu0 0.0
    %270 = vmatpush1.msra.mxu0 %v171
    %271 = vmatprep.subr.mxu0 0.0
    %272 = vmatpush1.msra.mxu0 %v172
    %273 = vmatprep.subr.mxu0 0.0
    %274 = vmatpush1.msra.mxu0 %v173
    %275 = vmatprep.subr.mxu0 0.0
    %276 = vmatpush1.msra.mxu0 %v174
    %277 = vmatprep.subr.mxu0 0.0
    %278 = vmatpush1.msra.mxu0 %v175
    %279 = vmatprep.subr.mxu0 0.0
    %280 = vmatpush1.msra.mxu0 %v176
    %281 = vmatprep.subr.mxu0 0.0
    %282 = vmatpush1.msra.mxu0 0.0
    %283 = vmatprep.subr.mxu0 0.0
    %284 = vmatpush1.msra.mxu0 0.0
    %285 = vmatprep.subr.mxu0 0.0
    %286 = vmatpush1.msra.mxu0 0.0
    %287 = vmatprep.subr.mxu0 0.0
    %288 = vmatpush1.msra.mxu0 0.0
    %289 = vmatprep.subr.mxu0 0.0
    %290 = vmatpush1.msra.mxu0 0.0
    %291 = vmatprep.subr.mxu0 0.0
    %292 = vmatpush1.msra.mxu0 0.0
    %293 = vmatprep.subr.mxu0 0.0
    %294 = vmatpush1.msra.mxu0 0.0
    %295 = vmatprep.subr.mxu0 0.0
    %296 = vmatpush1.msra.mxu0 0.0
    %297 = vmatprep.subr.mxu0 0.0
    %298 = vmatpush1.msra.mxu0 0.0
    %299 = vmatprep.subr.mxu0 0.0
    %300 = vmatpush1.msra.mxu0 0.0
    %301 = vmatprep.subr.mxu0 0.0
    %302 = vmatpush1.msra.mxu0 0.0
    %303 = vmatprep.subr.mxu0 0.0
    %304 = vmatpush1.msra.mxu0 0.0
    %305 = vmatprep.subr.mxu0 0.0
    %306 = vmatpush1.msra.mxu0 0.0
    %307 = vmatprep.subr.mxu0 0.0
    %308 = vmatpush1.msra.mxu0 0.0
    %309 = vmatprep.subr.mxu0 0.0
    %310 = vmatpush1.msra.mxu0 0.0
    %311 = vmatprep.subr.mxu0 0.0
    %312 = vmatpush1.msra.mxu0 0.0
    %313 = vmatprep.mubr.f32.mxu0 0.0
    %314 = vmatmul.mubr.f32.gmra.mrb[0].mxu0 %v248
    %v315 = vpop.f32.mrb[0].mxu0
    %v316 = vadd.f32 0.0, %v315
    %v317 = vpop.f32.mrb[0].mxu0
    %318 = vdwg.mxu0
    %v320 = vrot.slane %v316, 7
    %v322 = vadd.f32 %v158, %v320
    %v323 = vtanh.pop %v322
    %v325 = vrot.slane %v323, 1
    %327 = vmatprep.subr.mxu0 0.0
    %328 = vmatpush1.msra.mxu0 %v161
    %329 = vmatprep.subr.mxu0 0.0
    %330 = vmatpush1.msra.mxu0 %v162
    %331 = vmatprep.subr.mxu0 0.0
    %332 = vmatpush1.msra.mxu0 %v163
    %333 = vmatprep.subr.mxu0 0.0
    %334 = vmatpush1.msra.mxu0 %v164
    %335 = vmatprep.subr.mxu0 0.0
    %336 = vmatpush1.msra.mxu0 %v165
    %337 = vmatprep.subr.mxu0 0.0
    %338 = vmatpush1.msra.mxu0 %v166
    %339 = vmatprep.subr.mxu0 0.0
    %340 = vmatpush1.msra.mxu0 %v167
    %341 = vmatprep.subr.mxu0 0.0
    %342 = vmatpush1.msra.mxu0 %v168
    %343 = vmatprep.subr.mxu0 0.0
    %344 = vmatpush1.msra.mxu0 %v169
    %345 = vmatprep.subr.mxu0 0.0
    %346 = vmatpush1.msra.mxu0 %v170
    %347 = vmatprep.subr.mxu0 0.0
    %348 = vmatpush1.msra.mxu0 %v171
    %349 = vmatprep.subr.mxu0 0.0
    %350 = vmatpush1.msra.mxu0 %v172
    %351 = vmatprep.subr.mxu0 0.0
    %352 = vmatpush1.msra.mxu0 %v173
    %353 = vmatprep.subr.mxu0 0.0
    %354 = vmatpush1.msra.mxu0 %v174
    %355 = vmatprep.subr.mxu0 0.0
    %356 = vmatpush1.msra.mxu0 %v175
    %357 = vmatprep.subr.mxu0 0.0
    %358 = vmatpush1.msra.mxu0 %v176
    %359 = vmatprep.subr.mxu0 0.0
    %360 = vmatpush1.msra.mxu0 0.0
    %361 = vmatprep.subr.mxu0 0.0
    %362 = vmatpush1.msra.mxu0 0.0
    %363 = vmatprep.subr.mxu0 0.0
    %364 = vmatpush1.msra.mxu0 0.0
    %365 = vmatprep.subr.mxu0 0.0
    %366 = vmatpush1.msra.mxu0 0.0
    %367 = vmatprep.subr.mxu0 0.0
    %368 = vmatpush1.msra.mxu0 0.0
    %369 = vmatprep.subr.mxu0 0.0
    %370 = vmatpush1.msra.mxu0 0.0
    %371 = vmatprep.subr.mxu0 0.0
    %372 = vmatpush1.msra.mxu0 0.0
    %373 = vmatprep.subr.mxu0 0.0
    %374 = vmatpush1.msra.mxu0 0.0
    %375 = vmatprep.subr.mxu0 0.0
    %376 = vmatpush1.msra.mxu0 0.0
    %377 = vmatprep.subr.mxu0 0.0
    %378 = vmatpush1.msra.mxu0 0.0
    %379 = vmatprep.subr.mxu0 0.0
    %380 = vmatpush1.msra.mxu0 0.0
    %381 = vmatprep.subr.mxu0 0.0
    %382 = vmatpush1.msra.mxu0 0.0
    %383 = vmatprep.subr.mxu0 0.0
    %384 = vmatpush1.msra.mxu0 0.0
    %385 = vmatprep.subr.mxu0 0.0
    %386 = vmatpush1.msra.mxu0 0.0
    %387 = vmatprep.subr.mxu0 0.0
    %388 = vmatpush1.msra.mxu0 0.0
    %389 = vmatprep.subr.mxu0 0.0
    %390 = vmatpush1.msra.mxu0 0.0
    %391 = vmatprep.mubr.f32.mxu0 0.0
    %392 = vmatmul.mubr.f32.gmra.mrb[0].mxu0 %v325
    %v393 = vpop.f32.mrb[0].mxu0
    %v394 = vadd.f32 0.0, %v393
    %v395 = vpop.f32.mrb[0].mxu0
    %396 = vdwg.mxu0
    %v398 = vrot.slane %v394, 6
    %v400 = vadd.f32 %v158, %v398
    %v401 = vtanh.pop %v400
    %v403 = vrot.slane %v401, 2
    %405 = vmatprep.subr.mxu0 0.0
    %406 = vmatpush1.msra.mxu0 %v161
    %407 = vmatprep.subr.mxu0 0.0
    %408 = vmatpush1.msra.mxu0 %v162
    %409 = vmatprep.subr.mxu0 0.0
    %410 = vmatpush1.msra.mxu0 %v163
    %411 = vmatprep.subr.mxu0 0.0
    %412 = vmatpush1.msra.mxu0 %v164
    %413 = vmatprep.subr.mxu0 0.0
    %414 = vmatpush1.msra.mxu0 %v165
    %415 = vmatprep.subr.mxu0 0.0
    %416 = vmatpush1.msra.mxu0 %v166
    %417 = vmatprep.subr.mxu0 0.0
    %418 = vmatpush1.msra.mxu0 %v167
    %419 = vmatprep.subr.mxu0 0.0
    %420 = vmatpush1.msra.mxu0 %v168
    %421 = vmatprep.subr.mxu0 0.0
    %422 = vmatpush1.msra.mxu0 %v169
    %423 = vmatprep.subr.mxu0 0.0
    %424 = vmatpush1.msra.mxu0 %v170
    %425 = vmatprep.subr.mxu0 0.0
    %426 = vmatpush1.msra.mxu0 %v171
    %427 = vmatprep.subr.mxu0 0.0
    %428 = vmatpush1.msra.mxu0 %v172
    %429 = vmatprep.subr.mxu0 0.0
    %430 = vmatpush1.msra.mxu0 %v173
    %431 = vmatprep.subr.mxu0 0.0
    %432 = vmatpush1.msra.mxu0 %v174
    %433 = vmatprep.subr.mxu0 0.0
    %434 = vmatpush1.msra.mxu0 %v175
    %435 = vmatprep.subr.mxu0 0.0
    %436 = vmatpush1.msra.mxu0 %v176
    %437 = vmatprep.subr.mxu0 0.0
    %438 = vmatpush1.msra.mxu0 0.0
    %439 = vmatprep.subr.mxu0 0.0
    %440 = vmatpush1.msra.mxu0 0.0
    %441 = vmatprep.subr.mxu0 0.0
    %442 = vmatpush1.msra.mxu0 0.0
    %443 = vmatprep.subr.mxu0 0.0
    %444 = vmatpush1.msra.mxu0 0.0
    %445 = vmatprep.subr.mxu0 0.0
    %446 = vmatpush1.msra.mxu0 0.0
    %447 = vmatprep.subr.mxu0 0.0
    %448 = vmatpush1.msra.mxu0 0.0
    %449 = vmatprep.subr.mxu0 0.0
    %450 = vmatpush1.msra.mxu0 0.0
    %451 = vmatprep.subr.mxu0 0.0
    %452 = vmatpush1.msra.mxu0 0.0
    %453 = vmatprep.subr.mxu0 0.0
    %454 = vmatpush1.msra.mxu0 0.0
    %455 = vmatprep.subr.mxu0 0.0
    %456 = vmatpush1.msra.mxu0 0.0
    %457 = vmatprep.subr.mxu0 0.0
    %458 = vmatpush1.msra.mxu0 0.0
    %459 = vmatprep.subr.mxu0 0.0
    %460 = vmatpush1.msra.mxu0 0.0
    %461 = vmatprep.subr.mxu0 0.0
    %462 = vmatpush1.msra.mxu0 0.0
    %463 = vmatprep.subr.mxu0 0.0
    %464 = vmatpush1.msra.mxu0 0.0
    %465 = vmatprep.subr.mxu0 0.0
    %466 = vmatpush1.msra.mxu0 0.0
    %467 = vmatprep.subr.mxu0 0.0
    %468 = vmatpush1.msra.mxu0 0.0
    %469 = vmatprep.mubr.f32.mxu0 0.0
    %470 = vmatmul.mubr.f32.gmra.mrb[0].mxu0 %v403
    %v471 = vpop.f32.mrb[0].mxu0
    %v472 = vadd.f32 0.0, %v471
    %v473 = vpop.f32.mrb[0].mxu0
    %474 = vdwg.mxu0
    %v476 = vrot.slane %v472, 5
    %v478 = vadd.f32 %v158, %v476
    %v479 = vtanh.pop %v478
    %v481 = vrot.slane %v479, 3
    %483 = vmatprep.subr.mxu0 0.0
    %484 = vmatpush1.msra.mxu0 %v161
    %485 = vmatprep.subr.mxu0 0.0
    %486 = vmatpush1.msra.mxu0 %v162
    %487 = vmatprep.subr.mxu0 0.0
    %488 = vmatpush1.msra.mxu0 %v163
    %489 = vmatprep.subr.mxu0 0.0
    %490 = vmatpush1.msra.mxu0 %v164
    %491 = vmatprep.subr.mxu0 0.0
    %492 = vmatpush1.msra.mxu0 %v165
    %493 = vmatprep.subr.mxu0 0.0
    %494 = vmatpush1.msra.mxu0 %v166
    %495 = vmatprep.subr.mxu0 0.0
    %496 = vmatpush1.msra.mxu0 %v167
    %497 = vmatprep.subr.mxu0 0.0
    %498 = vmatpush1.msra.mxu0 %v168
    %499 = vmatprep.subr.mxu0 0.0
    %500 = vmatpush1.msra.mxu0 %v169
    %501 = vmatprep.subr.mxu0 0.0
    %502 = vmatpush1.msra.mxu0 %v170
    %503 = vmatprep.subr.mxu0 0.0
    %504 = vmatpush1.msra.mxu0 %v171
    %505 = vmatprep.subr.mxu0 0.0
    %506 = vmatpush1.msra.mxu0 %v172
    %507 = vmatprep.subr.mxu0 0.0
    %508 = vmatpush1.msra.mxu0 %v173
    %509 = vmatprep.subr.mxu0 0.0
    %510 = vmatpush1.msra.mxu0 %v174
    %511 = vmatprep.subr.mxu0 0.0
    %512 = vmatpush1.msra.mxu0 %v175
    %513 = vmatprep.subr.mxu0 0.0
    %514 = vmatpush1.msra.mxu0 %v176
    %515 = vmatprep.subr.mxu0 0.0
    %516 = vmatpush1.msra.mxu0 0.0
    %517 = vmatprep.subr.mxu0 0.0
    %518 = vmatpush1.msra.mxu0 0.0
    %519 = vmatprep.subr.mxu0 0.0
    %520 = vmatpush1.msra.mxu0 0.0
    %521 = vmatprep.subr.mxu0 0.0
    %522 = vmatpush1.msra.mxu0 0.0
    %523 = vmatprep.subr.mxu0 0.0
    %524 = vmatpush1.msra.mxu0 0.0
    %525 = vmatprep.subr.mxu0 0.0
    %526 = vmatpush1.msra.mxu0 0.0
    %527 = vmatprep.subr.mxu0 0.0
    %528 = vmatpush1.msra.mxu0 0.0
    %529 = vmatprep.subr.mxu0 0.0
    %530 = vmatpush1.msra.mxu0 0.0
    %531 = vmatprep.subr.mxu0 0.0
    %532 = vmatpush1.msra.mxu0 0.0
    %533 = vmatprep.subr.mxu0 0.0
    %534 = vmatpush1.msra.mxu0 0.0
    %535 = vmatprep.subr.mxu0 0.0
    %536 = vmatpush1.msra.mxu0 0.0
    %537 = vmatprep.subr.mxu0 0.0
    %538 = vmatpush1.msra.mxu0 0.0
    %539 = vmatprep.subr.mxu0 0.0
    %540 = vmatpush1.msra.mxu0 0.0
    %541 = vmatprep.subr.mxu0 0.0
    %542 = vmatpush1.msra.mxu0 0.0
    %543 = vmatprep.subr.mxu0 0.0
    %544 = vmatpush1.msra.mxu0 0.0
    %545 = vmatprep.subr.mxu0 0.0
    %546 = vmatpush1.msra.mxu0 0.0
    %547 = vmatprep.mubr.f32.mxu0 0.0
    %548 = vmatmul.mubr.f32.gmra.mrb[0].mxu0 %v481
    %v549 = vpop.f32.mrb[0].mxu0
    %v550 = vadd.f32 0.0, %v549
    %v551 = vpop.f32.mrb[0].mxu0
    %552 = vdwg.mxu0
    %v554 = vrot.slane %v550, 4
    %v556 = vadd.f32 %v158, %v554
    %v557 = vtanh.pop %v556
    %v559 = vrot.slane %v557, 4
    %561 = vmatprep.subr.mxu0 0.0
    %562 = vmatpush1.msra.mxu0 %v161
    %563 = vmatprep.subr.mxu0 0.0
    %564 = vmatpush1.msra.mxu0 %v162
    %565 = vmatprep.subr.mxu0 0.0
    %566 = vmatpush1.msra.mxu0 %v163
    %567 = vmatprep.subr.mxu0 0.0
    %568 = vmatpush1.msra.mxu0 %v164
    %569 = vmatprep.subr.mxu0 0.0
    %570 = vmatpush1.msra.mxu0 %v165
    %571 = vmatprep.subr.mxu0 0.0
    %572 = vmatpush1.msra.mxu0 %v166
    %573 = vmatprep.subr.mxu0 0.0
    %574 = vmatpush1.msra.mxu0 %v167
    %575 = vmatprep.subr.mxu0 0.0
    %576 = vmatpush1.msra.mxu0 %v168
    %577 = vmatprep.subr.mxu0 0.0
    %578 = vmatpush1.msra.mxu0 %v169
    %579 = vmatprep.subr.mxu0 0.0
    %580 = vmatpush1.msra.mxu0 %v170
    %581 = vmatprep.subr.mxu0 0.0
    %582 = vmatpush1.msra.mxu0 %v171
    %583 = vmatprep.subr.mxu0 0.0
    %584 = vmatpush1.msra.mxu0 %v172
    %585 = vmatprep.subr.mxu0 0.0
    %586 = vmatpush1.msra.mxu0 %v173
    %587 = vmatprep.subr.mxu0 0.0
    %588 = vmatpush1.msra.mxu0 %v174
    %589 = vmatprep.subr.mxu0 0.0
    %590 = vmatpush1.msra.mxu0 %v175
    %591 = vmatprep.subr.mxu0 0.0
    %592 = vmatpush1.msra.mxu0 %v176
    %593 = vmatprep.subr.mxu0 0.0
    %594 = vmatpush1.msra.mxu0 0.0
    %595 = vmatprep.subr.mxu0 0.0
    %596 = vmatpush1.msra.mxu0 0.0
    %597 = vmatprep.subr.mxu0 0.0
    %598 = vmatpush1.msra.mxu0 0.0
    %599 = vmatprep.subr.mxu0 0.0
    %600 = vmatpush1.msra.mxu0 0.0
    %601 = vmatprep.subr.mxu0 0.0
    %602 = vmatpush1.msra.mxu0 0.0
    %603 = vmatprep.subr.mxu0 0.0
    %604 = vmatpush1.msra.mxu0 0.0
    %605 = vmatprep.subr.mxu0 0.0
    %606 = vmatpush1.msra.mxu0 0.0
    %607 = vmatprep.subr.mxu0 0.0
    %608 = vmatpush1.msra.mxu0 0.0
    %609 = vmatprep.subr.mxu0 0.0
    %610 = vmatpush1.msra.mxu0 0.0
    %611 = vmatprep.subr.mxu0 0.0
    %612 = vmatpush1.msra.mxu0 0.0
    %613 = vmatprep.subr.mxu0 0.0
    %614 = vmatpush1.msra.mxu0 0.0
    %615 = vmatprep.subr.mxu0 0.0
    %616 = vmatpush1.msra.mxu0 0.0
    %617 = vmatprep.subr.mxu0 0.0
    %618 = vmatpush1.msra.mxu0 0.0
    %619 = vmatprep.subr.mxu0 0.0
    %620 = vmatpush1.msra.mxu0 0.0
    %621 = vmatprep.subr.mxu0 0.0
    %622 = vmatpush1.msra.mxu0 0.0
    %623 = vmatprep.subr.mxu0 0.0
    %624 = vmatpush1.msra.mxu0 0.0
    %625 = vmatprep.mubr.f32.mxu0 0.0
    %626 = vmatmul.mubr.f32.gmra.mrb[0].mxu0 %v559
    %v627 = vpop.f32.mrb[0].mxu0
    %v628 = vadd.f32 0.0, %v627
    %v629 = vpop.f32.mrb[0].mxu0
    %630 = vdwg.mxu0
    %v632 = vrot.slane %v628, 3
    %v634 = vadd.f32 %v158, %v632
    %v635 = vtanh.pop %v634
    %v637 = vrot.slane %v635, 5
    %639 = vmatprep.subr.mxu0 0.0
    %640 = vmatpush1.msra.mxu0 %v161
    %641 = vmatprep.subr.mxu0 0.0
    %642 = vmatpush1.msra.mxu0 %v162
    %643 = vmatprep.subr.mxu0 0.0
    %644 = vmatpush1.msra.mxu0 %v163
    %645 = vmatprep.subr.mxu0 0.0
    %646 = vmatpush1.msra.mxu0 %v164
    %647 = vmatprep.subr.mxu0 0.0
    %648 = vmatpush1.msra.mxu0 %v165
    %649 = vmatprep.subr.mxu0 0.0
    %650 = vmatpush1.msra.mxu0 %v166
    %651 = vmatprep.subr.mxu0 0.0
    %652 = vmatpush1.msra.mxu0 %v167
    %653 = vmatprep.subr.mxu0 0.0
    %654 = vmatpush1.msra.mxu0 %v168
    %655 = vmatprep.subr.mxu0 0.0
    %656 = vmatpush1.msra.mxu0 %v169
    %657 = vmatprep.subr.mxu0 0.0
    %658 = vmatpush1.msra.mxu0 %v170
    %659 = vmatprep.subr.mxu0 0.0
    %660 = vmatpush1.msra.mxu0 %v171
    %661 = vmatprep.subr.mxu0 0.0
    %662 = vmatpush1.msra.mxu0 %v172
    %663 = vmatprep.subr.mxu0 0.0
    %664 = vmatpush1.msra.mxu0 %v173
    %665 = vmatprep.subr.mxu0 0.0
    %666 = vmatpush1.msra.mxu0 %v174
    %667 = vmatprep.subr.mxu0 0.0
    %668 = vmatpush1.msra.mxu0 %v175
    %669 = vmatprep.subr.mxu0 0.0
    %670 = vmatpush1.msra.mxu0 %v176
    %671 = vmatprep.subr.mxu0 0.0
    %672 = vmatpush1.msra.mxu0 0.0
    %673 = vmatprep.subr.mxu0 0.0
    %674 = vmatpush1.msra.mxu0 0.0
    %675 = vmatprep.subr.mxu0 0.0
    %676 = vmatpush1.msra.mxu0 0.0
    %677 = vmatprep.subr.mxu0 0.0
    %678 = vmatpush1.msra.mxu0 0.0
    %679 = vmatprep.subr.mxu0 0.0
    %680 = vmatpush1.msra.mxu0 0.0
    %681 = vmatprep.subr.mxu0 0.0
    %682 = vmatpush1.msra.mxu0 0.0
    %683 = vmatprep.subr.mxu0 0.0
    %684 = vmatpush1.msra.mxu0 0.0
    %685 = vmatprep.subr.mxu0 0.0
    %686 = vmatpush1.msra.mxu0 0.0
    %687 = vmatprep.subr.mxu0 0.0
    %688 = vmatpush1.msra.mxu0 0.0
    %689 = vmatprep.subr.mxu0 0.0
    %690 = vmatpush1.msra.mxu0 0.0
    %691 = vmatprep.subr.mxu0 0.0
    %692 = vmatpush1.msra.mxu0 0.0
    %693 = vmatprep.subr.mxu0 0.0
    %694 = vmatpush1.msra.mxu0 0.0
    %695 = vmatprep.subr.mxu0 0.0
    %696 = vmatpush1.msra.mxu0 0.0
    %697 = vmatprep.subr.mxu0 0.0
    %698 = vmatpush1.msra.mxu0 0.0
    %699 = vmatprep.subr.mxu0 0.0
    %700 = vmatpush1.msra.mxu0 0.0
    %701 = vmatprep.subr.mxu0 0.0
    %702 = vmatpush1.msra.mxu0 0.0
    %703 = vmatprep.mubr.f32.mxu0 0.0
    %704 = vmatmul.mubr.f32.gmra.mrb[0].mxu0 %v637
    %v705 = vpop.f32.mrb[0].mxu0
    %v706 = vadd.f32 0.0, %v705
    %v707 = vpop.f32.mrb[0].mxu0
    %708 = vdwg.mxu0
    %v710 = vrot.slane %v706, 2
    %v712 = vadd.f32 %v158, %v710
    %v713 = vtanh.pop %v712
    %v715 = vrot.slane %v713, 6
    %717 = vmatprep.subr.mxu0 0.0
    %718 = vmatpush1.msra.mxu0 %v161
    %719 = vmatprep.subr.mxu0 0.0
    %720 = vmatpush1.msra.mxu0 %v162
    %721 = vmatprep.subr.mxu0 0.0
    %722 = vmatpush1.msra.mxu0 %v163
    %723 = vmatprep.subr.mxu0 0.0
    %724 = vmatpush1.msra.mxu0 %v164
    %725 = vmatprep.subr.mxu0 0.0
    %726 = vmatpush1.msra.mxu0 %v165
    %727 = vmatprep.subr.mxu0 0.0
    %728 = vmatpush1.msra.mxu0 %v166
    %729 = vmatprep.subr.mxu0 0.0
    %730 = vmatpush1.msra.mxu0 %v167
    %731 = vmatprep.subr.mxu0 0.0
    %732 = vmatpush1.msra.mxu0 %v168
    %733 = vmatprep.subr.mxu0 0.0
    %734 = vmatpush1.msra.mxu0 %v169
    %735 = vmatprep.subr.mxu0 0.0
    %736 = vmatpush1.msra.mxu0 %v170
    %737 = vmatprep.subr.mxu0 0.0
    %738 = vmatpush1.msra.mxu0 %v171
    %739 = vmatprep.subr.mxu0 0.0
    %740 = vmatpush1.msra.mxu0 %v172
    %741 = vmatprep.subr.mxu0 0.0
    %742 = vmatpush1.msra.mxu0 %v173
    %743 = vmatprep.subr.mxu0 0.0
    %744 = vmatpush1.msra.mxu0 %v174
    %745 = vmatprep.subr.mxu0 0.0
    %746 = vmatpush1.msra.mxu0 %v175
    %747 = vmatprep.subr.mxu0 0.0
    %748 = vmatpush1.msra.mxu0 %v176
    %749 = vmatprep.subr.mxu0 0.0
    %750 = vmatpush1.msra.mxu0 0.0
    %751 = vmatprep.subr.mxu0 0.0
    %752 = vmatpush1.msra.mxu0 0.0
    %753 = vmatprep.subr.mxu0 0.0
    %754 = vmatpush1.msra.mxu0 0.0
    %755 = vmatprep.subr.mxu0 0.0
    %756 = vmatpush1.msra.mxu0 0.0
    %757 = vmatprep.subr.mxu0 0.0
    %758 = vmatpush1.msra.mxu0 0.0
    %759 = vmatprep.subr.mxu0 0.0
    %760 = vmatpush1.msra.mxu0 0.0
    %761 = vmatprep.subr.mxu0 0.0
    %762 = vmatpush1.msra.mxu0 0.0
    %763 = vmatprep.subr.mxu0 0.0
    %764 = vmatpush1.msra.mxu0 0.0
    %765 = vmatprep.subr.mxu0 0.0
    %766 = vmatpush1.msra.mxu0 0.0
    %767 = vmatprep.subr.mxu0 0.0
    %768 = vmatpush1.msra.mxu0 0.0
    %769 = vmatprep.subr.mxu0 0.0
    %770 = vmatpush1.msra.mxu0 0.0
    %771 = vmatprep.subr.mxu0 0.0
    %772 = vmatpush1.msra.mxu0 0.0
    %773 = vmatprep.subr.mxu0 0.0
    %774 = vmatpush1.msra.mxu0 0.0
    %775 = vmatprep.subr.mxu0 0.0
    %776 = vmatpush1.msra.mxu0 0.0
    %777 = vmatprep.subr.mxu0 0.0
    %778 = vmatpush1.msra.mxu0 0.0
    %779 = vmatprep.subr.mxu0 0.0
    %780 = vmatpush1.msra.mxu0 0.0
    %781 = vmatprep.mubr.f32.mxu0 0.0
    %782 = vmatmul.mubr.f32.gmra.mrb[0].mxu0 %v715
    %v783 = vpop.f32.mrb[0].mxu0
    %v784 = vadd.f32 0.0, %v783
    %v785 = vpop.f32.mrb[0].mxu0
    %786 = vdwg.mxu0
    %v788 = vrot.slane %v784, 1
    %v790 = vadd.f32 %v158, %v788
    %v791 = vtanh.pop %v790
    %vm792 = vcmask 1040384
    %v793 = vsel %vm792, %v248, %v323
    %vm794 = vcmask 1041408
    %v795 = vsel %vm794, %v793, %v401
    %vm796 = vcmask 1042432
    %v797 = vsel %vm796, %v795, %v479
    %vm798 = vcmask 1043456
    %v799 = vsel %vm798, %v797, %v557
    %vm800 = vcmask 1044480
    %v801 = vsel %vm800, %v799, %v635
    %vm802 = vcmask 1045504
    %v803 = vsel %vm802, %v801, %v713
    %vm804 = vcmask 1046528
    %v805 = vsel %vm804, %v803, %v791
    %v806 = vld [vmem:[#allocation8] sm:$0xff]
    %v807 = vld [vmem:[#allocation8 + $0x8] sm:$0xff]
    %v808 = vld [vmem:[#allocation8 + $0x10] sm:$0xff]
    %v809 = vld [vmem:[#allocation8 + $0x18] sm:$0xff]
    %v810 = vld [vmem:[#allocation8 + $0x20] sm:$0xff]
    %v811 = vld [vmem:[#allocation8 + $0x28] sm:$0xff]
    %v812 = vld [vmem:[#allocation8 + $0x30] sm:$0xff]
    %v813 = vld [vmem:[#allocation8 + $0x38] sm:$0xff]
    %v814 = vld [vmem:[#allocation8 + $0x40] sm:$0xff]
    %v815 = vld [vmem:[#allocation8 + $0x48] sm:$0xff]
    %v816 = vld [vmem:[#allocation8 + $0x50] sm:$0xff]
    %v817 = vld [vmem:[#allocation8 + $0x58] sm:$0xff]
    %v818 = vld [vmem:[#allocation8 + $0x60] sm:$0xff]
    %v819 = vld [vmem:[#allocation8 + $0x68] sm:$0xff]
    %v820 = vld [vmem:[#allocation8 + $0x70] sm:$0xff]
    %v821 = vld [vmem:[#allocation8 + $0x78] sm:$0xff]
    %v822 = vld [vmem:[%s5] sm:$0x1]
    %v824 = vlaneseq
    %v825 = vshrl.u32 %v824, 7
    %v826 = vsub.s32 0, %v825
    %v827 = vrot.slane %v822, %v826
    %829 = vmatprep.subr.mxu0 0.0
    %830 = vmatpush1.msra.mxu0 %v806
    %831 = vmatprep.subr.mxu0 0.0
    %832 = vmatpush1.msra.mxu0 %v807
    %833 = vmatprep.subr.mxu0 0.0
    %834 = vmatpush1.msra.mxu0 %v808
    %835 = vmatprep.subr.mxu0 0.0
    %836 = vmatpush1.msra.mxu0 %v809
    %837 = vmatprep.subr.mxu0 0.0
    %838 = vmatpush1.msra.mxu0 %v810
    %839 = vmatprep.subr.mxu0 0.0
    %840 = vmatpush1.msra.mxu0 %v811
    %841 = vmatprep.subr.mxu0 0.0
    %842 = vmatpush1.msra.mxu0 %v812
    %843 = vmatprep.subr.mxu0 0.0
    %844 = vmatpush1.msra.mxu0 %v813
    %845 = vmatprep.subr.mxu0 0.0
    %846 = vmatpush1.msra.mxu0 %v814
    %847 = vmatprep.subr.mxu0 0.0
    %848 = vmatpush1.msra.mxu0 %v815
    %849 = vmatprep.subr.mxu0 0.0
    %850 = vmatpush1.msra.mxu0 %v816
    %851 = vmatprep.subr.mxu0 0.0
    %852 = vmatpush1.msra.mxu0 %v817
    %853 = vmatprep.subr.mxu0 0.0
    %854 = vmatpush1.msra.mxu0 %v818
    %855 = vmatprep.subr.mxu0 0.0
    %856 = vmatpush1.msra.mxu0 %v819
    %857 = vmatprep.subr.mxu0 0.0
    %858 = vmatpush1.msra.mxu0 %v820
    %859 = vmatprep.subr.mxu0 0.0
    %860 = vmatpush1.msra.mxu0 %v821
    %861 = vmatprep.subr.mxu0 0.0
    %862 = vmatpush1.msra.mxu0 0.0
    %863 = vmatprep.subr.mxu0 0.0
    %864 = vmatpush1.msra.mxu0 0.0
    %865 = vmatprep.subr.mxu0 0.0
    %866 = vmatpush1.msra.mxu0 0.0
    %867 = vmatprep.subr.mxu0 0.0
    %868 = vmatpush1.msra.mxu0 0.0
    %869 = vmatprep.subr.mxu0 0.0
    %870 = vmatpush1.msra.mxu0 0.0
    %871 = vmatprep.subr.mxu0 0.0
    %872 = vmatpush1.msra.mxu0 0.0
    %873 = vmatprep.subr.mxu0 0.0
    %874 = vmatpush1.msra.mxu0 0.0
    %875 = vmatprep.subr.mxu0 0.0
    %876 = vmatpush1.msra.mxu0 0.0
    %877 = vmatprep.subr.mxu0 0.0
    %878 = vmatpush1.msra.mxu0 0.0
    %879 = vmatprep.subr.mxu0 0.0
    %880 = vmatpush1.msra.mxu0 0.0
    %881 = vmatprep.subr.mxu0 0.0
    %882 = vmatpush1.msra.mxu0 0.0
    %883 = vmatprep.subr.mxu0 0.0
    %884 = vmatpush1.msra.mxu0 0.0
    %885 = vmatprep.subr.mxu0 0.0
    %886 = vmatpush1.msra.mxu0 0.0
    %887 = vmatprep.subr.mxu0 0.0
    %888 = vmatpush1.msra.mxu0 0.0
    %889 = vmatprep.subr.mxu0 0.0
    %890 = vmatpush1.msra.mxu0 0.0
    %891 = vmatprep.subr.mxu0 0.0
    %892 = vmatpush1.msra.mxu0 0.0
    %893 = vmatprep.mubr.f32.mxu0 0.0
    %894 = vmatmul.mubr.f32.gmra.mrb[0].mxu0 %v805
    %v895 = vpop.f32.mrb[0].mxu0
    %v896 = vadd.f32 %v827, %v895
    %v897 = vpop.f32.mrb[0].mxu0
    %898 = vdwg.mxu0
    %899 = vmax.xlane.f32.xlu0 %v896
    %v900 = vpop.xlane.xlu0 %899
    %v901 = vsub.f32 %v896, %v900
    %v902 = vmul.f32 %v901, 1.442695
    %v903 = vpow.pop %v902
    %904 = vadd.xlane.f32.xlu0 %v903
    %v905 = vpop.xlane.xlu0 %904
    %v906 = vlog2.pop %v905
    %v907 = vmul.f32 %v906, 0.6931472
    %v908 = vsub.f32 %v901, %v907
    %909 = vst [vmem:[#allocation10] sm:$0xff] %v908
    // Predicated region
    $region42: #{tpu_custom_call.1} parent=1 // pred_check
      _
    $region43: #{tpu_custom_call.1} parent=1 // pred_check_branch
      %911 = sbr.rel (0) target = $region45
    $region44: #{tpu_custom_call.1} parent=1 // pred_region
      %s913 = ssub.s32 128, 128
      %914 = vsyncadd [#allocation4], %s913
      %s916 = sshll.u32 [#allocation10], 4
      %s917 = int_to_ptr.vmem [resolvable:$true] %s916
      %919 = dma.vmem_to_hbm [thread:$0]  %s917, 128, %s6, [#allocation4]
    $region45: #{tpu_custom_call.1} parent=1 // pred_fallthru
      _
    // Predicated region
    $region46: #{tpu_custom_call.1} parent=1 // pred_check
      _
    $region47: #{tpu_custom_call.1} parent=1 // pred_check_branch
      %921 = sbr.rel (0) target = $region49
    $region48: #{tpu_custom_call.1} parent=1 // pred_region
      %922 = dma.done [#allocation4], 128
    $region49: #{tpu_custom_call.1} parent=1 // pred_fallthru
      _
    %923 = vsyncpa [#allocation3], 1
    %924 = vsyncpa [#allocation6], 1
    %925 = vsyncpa [#allocation9], 1
    %926 = vsyncpa [#allocation4], 1

</llo_original>
